<compile_context>
chip_gen: v7x
topology: tpu7x:2x2x1
jax: 0.10.0
libtpu: 0.0.40
codegen_flags: <defaults>
</compile_context>

<pallas_src>
import functools

import jax
import jax.numpy as jnp
from jax.experimental import pallas as pl
from jax.experimental.pallas import tpu as pltpu

LANES = 512            # lane-dense last dim (multiple of 128)
MAX_TILE_ROWS = 512    # 512x512 f32 block = 1 MiB per input per pipeline buffer
ACC_ROWS = 8           # vreg-height accumulator rows
_NUM_SPLITS = 2        # leading "parallel" axis (2 TCs on v7x; no-op on v5e/v6e)
_MIN_PALLAS_ELEMS = 65536   # below this, a fused XLA reduction wins
_PAD_LOGIT = -1e4      # with target 0: loss = -1e4 + (0 + 1e4) = exactly 0


def _min_sublanes(dtype):
    """Minimum legal sublane multiple for a dtype (8 for f32, 16 bf16, 32 int8)."""
    return max(8, 32 // dtype.itemsize)


def _bce_logits_sum_kernel(x_ref, y_ref, out_ref, acc_ref, *, pos_weight,
                           tile_rows, acc_rows, valid_rows, steps_per_split,
                           mask_rows):
    """Accumulates the sum of BCE-with-logits losses for one grid split."""
    s = pl.program_id(1)   # sequential ("arbitrary") reduction axis

    @pl.when(s == 0)
    def _init():
        acc_ref[...] = jnp.zeros_like(acc_ref)

    x = x_ref[...].astype(jnp.float32)
    y = y_ref[...].astype(jnp.float32)

    # Numerically stable formulation (identical to PyTorch's):
    #   loss = (1 - y) * x + lw * (log1p(exp(-|x|)) + max(-x, 0))
    #   lw   = 1 + (pos_weight - 1) * y          (== 1 when pos_weight == 1)
    softplus_neg = jnp.log1p(jnp.exp(-jnp.abs(x))) + jnp.maximum(-x, 0.0)
    if pos_weight == 1.0:
        loss = (1.0 - y) * x + softplus_neg
    else:
        loss = (1.0 - y) * x + (1.0 + (pos_weight - 1.0) * y) * softplus_neg

    if mask_rows:
        # Zero rows past the logical end of the array.  Covers both the ragged
        # (overrunning) final block and, when the block count is odd, the
        # clamped duplicate block re-read by the last split.
        c = pl.program_id(0)
        row0 = (c * steps_per_split + s) * tile_rows
        row_ids = jax.lax.broadcasted_iota(jnp.int32, (tile_rows, LANES), 0)
        loss = jnp.where(row_ids + row0 < valid_rows, loss, 0.0)

    # Fold the (tile_rows, LANES) loss tile into the small vreg-resident
    # accumulator: vreg-aligned static slices + VALU adds only, no tile-sized
    # accumulator VMEM traffic.
    if acc_rows == tile_rows:
        part = loss
    elif acc_rows == 1:
        part = jnp.sum(loss, axis=0, keepdims=True)
    else:
        part = loss[0:acc_rows, :]
        for r in range(1, tile_rows // acc_rows):
            part = part + loss[r * acc_rows:(r + 1) * acc_rows, :]
    acc_ref[...] += part

    @pl.when(s == pl.num_programs(1) - 1)
    def _finalize():
        # Single cross-lane/sublane reduction per split, on the last step only.
        out_ref[...] = jnp.sum(acc_ref[...], keepdims=True).reshape(1, 1, 1)


def _bce_logits_sum_xla(x, y, pos_weight):
    """Plain-XLA sum for tiny inputs where kernel/pad overhead dominates."""
    x = x.astype(jnp.float32)
    y = y.astype(jnp.float32)
    softplus_neg = jnp.log1p(jnp.exp(-jnp.abs(x))) + jnp.maximum(-x, 0.0)
    if pos_weight == 1.0:
        loss = (1.0 - y) * x + softplus_neg
    else:
        loss = (1.0 - y) * x + (1.0 + (pos_weight - 1.0) * y) * softplus_neg
    return jnp.sum(loss)


def _bce_logits_sum_pallas(x, y, pos_weight, max_tile_rows):
    n = x.shape[0]

    # Keep narrow target dtypes narrow (less HBM traffic); bool -> int8 so the
    # ref dtype is a plain 1-byte integer.  Upcast to f32 happens on the VPU.
    if y.dtype == jnp.bool_:
        y = y.astype(jnp.int8)

    rem = n % LANES
    if rem:
        # Lane alignment needs a pad, but only by <512 elements; padded logits
        # of -1e4 with target 0 contribute *exactly* zero loss in f32
        # (exp underflows to 0; -1e4 + max(1e4, 0) cancels exactly, and
        # log_weight reduces to 1 for target 0 regardless of pos_weight).
        pad = LANES - rem
        x = jnp.pad(x, (0, pad), constant_values=_PAD_LOGIT)
        y = jnp.pad(y, (0, pad))

    rows = x.shape[0] // LANES
    x2 = x.reshape(rows, LANES)   # free reshape (row-major, no copy)
    y2 = y.reshape(rows, LANES)

    # Dtype-aware tile sizing: the block's sublane dim must be a multiple of
    # the strictest per-dtype minimum, unless it spans the full array dim.
    sub = max(_min_sublanes(x2.dtype), _min_sublanes(y2.dtype))
    tile_rows = max(sub, (max_tile_rows // sub) * sub)
    if rows <= tile_rows:
        tile_rows = rows          # one full-height block: always layout-legal

    blocks = pl.cdiv(rows, tile_rows)
    num_splits = min(_NUM_SPLITS, blocks)
    steps = pl.cdiv(blocks, num_splits)
    mask_rows = (rows % tile_rows != 0) or (blocks % num_splits != 0)
    acc_rows = ACC_ROWS if tile_rows % ACC_ROWS == 0 else 1

    def block_index(c, s):
        # Clamp so an extra (odd-block-count) iteration of the last split
        # re-reads an in-bounds block; its contribution is zeroed by the mask.
        return (jnp.minimum(c * steps + s, blocks - 1), 0)

    kernel = functools.partial(
        _bce_logits_sum_kernel, pos_weight=pos_weight, tile_rows=tile_rows,
        acc_rows=acc_rows, valid_rows=rows, steps_per_split=steps,
        mask_rows=mask_rows)

    bytes_accessed = (x2.size * x2.dtype.itemsize
                      + y2.size * y2.dtype.itemsize + 4 * num_splits)

    partials = pl.pallas_call(
        kernel,
        out_shape=jax.ShapeDtypeStruct((num_splits, 1, 1), jnp.float32),
        grid_spec=pltpu.PrefetchScalarGridSpec(
            num_scalar_prefetch=0,
            grid=(num_splits, steps),
            in_specs=[
                pl.BlockSpec((tile_rows, LANES), block_index),
                pl.BlockSpec((tile_rows, LANES), block_index),
            ],
            out_specs=pl.BlockSpec((1, 1, 1), lambda c, s: (c, 0, 0)),
            scratch_shapes=[pltpu.VMEM((acc_rows, LANES), jnp.float32)],
        ),
        compiler_params=pltpu.CompilerParams(
            dimension_semantics=("parallel", "arbitrary")),
        cost_estimate=pl.CostEstimate(flops=12 * n, transcendentals=2 * n,
                                      bytes_accessed=int(bytes_accessed)),
    )(x2, y2)
    return jnp.sum(partials)


def bce_with_logits_loss(prediction, targets, *, reduction="mean",
                         pos_weight=1.0,
                         min_pallas_elements=_MIN_PALLAS_ELEMS,
                         max_tile_rows=MAX_TILE_ROWS):
    """Mirrors BCELoss.forward: nn.BCEWithLogitsLoss(reduction, pos_weight)."""
    if reduction not in ("mean", "sum"):
        # TODO(synk): reduction='none' (per-element output) not wired up; the
        # module's default is 'mean'.
        raise NotImplementedError(f"unsupported reduction: {reduction}")
    # TODO(synk): pos_weight is a static Python float (matches the module,
    # which fixes it at __init__); a traced per-call value would need an SMEM
    # scalar operand instead of functools.partial.
    pos_weight = float(pos_weight)

    x = prediction.reshape(-1)   # free (metadata-only) reshape
    y = targets.reshape(-1)
    n = x.shape[0]

    if n < min_pallas_elements:
        total = _bce_logits_sum_xla(x, y, pos_weight)
    else:
        total = _bce_logits_sum_pallas(x, y, pos_weight, max_tile_rows)

    if reduction == "mean":
        return total / jnp.float32(n)
    return total


def _reference_loss(prediction, targets, pos_weight, reduction="mean"):
    x = prediction.astype(jnp.float32).reshape(-1)
    y = targets.astype(jnp.float32).reshape(-1)
    lw = 1.0 + (pos_weight - 1.0) * y
    loss = (1.0 - y) * x + lw * (jnp.log1p(jnp.exp(-jnp.abs(x)))
                                 + jnp.maximum(-x, 0.0))
    return jnp.mean(loss) if reduction == "mean" else jnp.sum(loss)


if __name__ == "__main__":
    key = jax.random.PRNGKey(0)
    keys = jax.random.split(key, 8)

    def make(shape, kx, kt, tgt_dtype=jnp.float32):
        logits = jax.random.normal(kx, shape, dtype=jnp.float32)
        tgts = jax.random.uniform(kt, shape) > 0.5
        if tgt_dtype == jnp.bool_:
            return logits, tgts
        return logits, tgts.astype(tgt_dtype)

    checks = []

    # (1) Module-consistent small shape, Pallas path forced past the tiny-input
    #     fallback; pos_weight=1 (specialized branch) and pos_weight=2.
    pred, tgt = make((2, 4, 16, 16), keys[0], keys[1])
    for pw in (1.0, 2.0):
        got = bce_with_logits_loss(pred, tgt, reduction="mean", pos_weight=pw,
                                   min_pallas_elements=0)
        checks.append((got, _reference_loss(pred, tgt, pw, "mean")))

    # (2) Same small shape through the default tiny-input XLA fallback.
    got = bce_with_logits_loss(pred, tgt, reduction="mean", pos_weight=2.0)
    checks.append((got, _reference_loss(pred, tgt, 2.0, "mean")))

    # (3) Boolean targets (1 B/elem stream), multi-block grid with a ragged,
    #     in-kernel-masked final block, 'sum' reduction.
    pred, tgt = make((2, 4, 48, 48), keys[2], keys[3], tgt_dtype=jnp.bool_)
    got = bce_with_logits_loss(pred, tgt, reduction="sum", pos_weight=3.0,
                               min_pallas_elements=0, max_tile_rows=16)
    checks.append((got, _reference_loss(pred, tgt, 3.0, "sum")))

    # (4) bfloat16 targets (2 B/elem stream), even multi-step two-split grid.
    pred, tgt = make((2, 4, 64, 64), keys[4], keys[5], tgt_dtype=jnp.bfloat16)
    got = bce_with_logits_loss(pred, tgt, reduction="mean", pos_weight=0.5,
                               min_pallas_elements=0, max_tile_rows=16)
    checks.append((got, _reference_loss(pred, tgt, 0.5, "mean")))

    # (5) numel not a multiple of 512: small lane-alignment pad with exact-zero
    #     padded loss; default kernel path.
    pred, tgt = make((2, 4, 131, 67), keys[6], keys[7])
    got = bce_with_logits_loss(pred, tgt, reduction="mean", pos_weight=2.0)
    checks.append((got, _reference_loss(pred, tgt, 2.0, "mean")))

    for got, ref in checks:
        got = jax.block_until_ready(got)
        assert jnp.allclose(got, jnp.float32(ref), rtol=1e-4, atol=1e-5), (got, ref)

    print("KERNEL_OK")
</pallas_src>

<mosaic_0001>
module attributes {stable_mosaic.version = 11 : i64} {
  func.func @_bce_logits_sum_kernel(%arg0: i32, %arg1: i32, %arg2: memref<4x512xf32, #tpu.memory_space<vmem>>, %arg3: memref<4x512xf32, #tpu.memory_space<vmem>>, %arg4: memref<1x1x1xf32, #tpu.memory_space<vmem>>, %arg5: memref<1x512xf32, #tpu.memory_space<vmem>>) attributes {dimension_semantics = [#tpu.dimension_semantics<parallel>, #tpu.dimension_semantics<arbitrary>], iteration_bounds = array<i64: 1, 1>, scalar_prefetch = 0 : i64, scratch_operands = 1 : i64, tpu.core_type = #tpu.core_type<tc>, window_params = [{transform_indices = @transform_0, window_bounds = array<i64: 4, 512>}, {transform_indices = @transform_1, window_bounds = array<i64: 4, 512>}, {transform_indices = @transform_2, window_bounds = array<i64: 1, 1, 1>}]} {
    %c0_i32 = arith.constant 0 : i32
    %0 = arith.cmpi eq, %arg1, %c0_i32 : i32
    %1 = arith.extui %0 : i1 to i32
    %c0_i32_0 = arith.constant 0 : i32
    %2 = arith.cmpi ne, %1, %c0_i32_0 : i32
    scf.if %2 {
      %cst_14 = arith.constant 0.000000e+00 : f32
      %27 = vector.broadcast %cst_14 : f32 to vector<1x512xf32>
      %c0_15 = arith.constant 0 : index
      %c0_16 = arith.constant 0 : index
      %28 = vector.load %arg5[%c0_15, %c0_16] : memref<1x512xf32, #tpu.memory_space<vmem>>, vector<1x512xf32>
      tpu.vector_store %arg5[%c0_15, %c0_16], %27 {strides = array<i32>} : memref<1x512xf32, #tpu.memory_space<vmem>>, vector<1x512xf32>,
    } else {
    }
    %c0 = arith.constant 0 : index
    %c0_1 = arith.constant 0 : index
    %3 = vector.load %arg2[%c0, %c0_1] : memref<4x512xf32, #tpu.memory_space<vmem>>, vector<4x512xf32>
    %c0_2 = arith.constant 0 : index
    %c0_3 = arith.constant 0 : index
    %4 = vector.load %arg3[%c0_2, %c0_3] : memref<4x512xf32, #tpu.memory_space<vmem>>, vector<4x512xf32>
    %5 = math.absf %3 : vector<4x512xf32>
    %cst = arith.constant 0.000000e+00 : f32
    %6 = vector.broadcast %cst : f32 to vector<4x512xf32>
    %7 = arith.subf %6, %5 : vector<4x512xf32>
    %8 = math.exp %7 : vector<4x512xf32>
    %9 = math.log1p %8 : vector<4x512xf32>
    %cst_4 = arith.constant 0.000000e+00 : f32
    %10 = vector.broadcast %cst_4 : f32 to vector<4x512xf32>
    %11 = arith.subf %10, %3 : vector<4x512xf32>
    %cst_5 = arith.constant 0.000000e+00 : f32
    %12 = vector.broadcast %cst_5 : f32 to vector<4x512xf32>
    %13 = arith.maximumf %11, %12 : vector<4x512xf32>
    %14 = arith.addf %9, %13 : vector<4x512xf32>
    %cst_6 = arith.constant 1.000000e+00 : f32
    %15 = vector.broadcast %cst_6 : f32 to vector<4x512xf32>
    %16 = arith.subf %15, %4 : vector<4x512xf32>
    %17 = arith.mulf %16, %3 : vector<4x512xf32>
    %18 = arith.addf %17, %14 : vector<4x512xf32>
    %cst_7 = arith.constant dense<0.000000e+00> : vector<512xf32>
    %19 = vector.multi_reduction <add>, %18, %cst_7 [0] : vector<4x512xf32> to vector<512xf32>
    %20 = vector.shape_cast %19 : vector<512xf32> to vector<1x512xf32>
    %c0_8 = arith.constant 0 : index
    %c0_9 = arith.constant 0 : index
    %21 = vector.load %arg5[%c0_8, %c0_9] : memref<1x512xf32, #tpu.memory_space<vmem>>, vector<1x512xf32>
    %22 = arith.addf %21, %20 : vector<1x512xf32>
    %c0_10 = arith.constant 0 : index
    %c0_11 = arith.constant 0 : index
    %23 = vector.load %arg5[%c0_10, %c0_11] : memref<1x512xf32, #tpu.memory_space<vmem>>, vector<1x512xf32>
    tpu.vector_store %arg5[%c0_10, %c0_11], %22 {strides = array<i32>} : memref<1x512xf32, #tpu.memory_space<vmem>>, vector<1x512xf32>,
    %c0_i32_12 = arith.constant 0 : i32
    %24 = arith.cmpi eq, %arg1, %c0_i32_12 : i32
    %25 = arith.extui %24 : i1 to i32
    %c0_i32_13 = arith.constant 0 : i32
    %26 = arith.cmpi ne, %25, %c0_i32_13 : i32
    scf.if %26 {
      %c0_14 = arith.constant 0 : index
      %c0_15 = arith.constant 0 : index
      %27 = vector.load %arg5[%c0_14, %c0_15] : memref<1x512xf32, #tpu.memory_space<vmem>>, vector<1x512xf32>
      %28 = vector.shape_cast %27 : vector<1x512xf32> to vector<1x1x512xf32>
      %cst_16 = arith.constant dense<0.000000e+00> : vector<1xf32>
      %29 = vector.multi_reduction <add>, %28, %cst_16 [1, 2] : vector<1x1x512xf32> to vector<1xf32>
      %30 = vector.shape_cast %29 : vector<1xf32> to vector<1x1x1xf32>
      %31 = vector.extract %30[0, 0, 0] : f32 from vector<1x1x1xf32>
      %32 = vector.broadcast %31 : f32 to vector<1x1xf32>
      %33 = vector.shape_cast %32 : vector<1x1xf32> to vector<1x1x1xf32>
      %c0_17 = arith.constant 0 : index
      %c0_18 = arith.constant 0 : index
      %c0_19 = arith.constant 0 : index
      %34 = vector.load %arg4[%c0_17, %c0_18, %c0_19] : memref<1x1x1xf32, #tpu.memory_space<vmem>>, vector<1x1x1xf32>
      tpu.vector_store %arg4[%c0_17, %c0_18, %c0_19], %33 {strides = array<i32>} : memref<1x1x1xf32, #tpu.memory_space<vmem>>, vector<1x1x1xf32>,
    } else {
    }
    return
  }
  func.func @transform_0(%arg0: i32, %arg1: i32) -> (i32, i32) {
    %c1_i32 = arith.constant 1 : i32
    %0 = arith.muli %arg0, %c1_i32 : i32
    %1 = arith.addi %0, %arg1 : i32
    %c0_i32 = arith.constant 0 : i32
    %2 = arith.minsi %1, %c0_i32 : i32
    %c0_i32_0 = arith.constant 0 : i32
    %c0_i32_1 = arith.constant 0 : i32
    return %2, %c0_i32_0 : i32, i32
  }
  func.func @transform_1(%arg0: i32, %arg1: i32) -> (i32, i32) {
    %c1_i32 = arith.constant 1 : i32
    %0 = arith.muli %arg0, %c1_i32 : i32
    %1 = arith.addi %0, %arg1 : i32
    %c0_i32 = arith.constant 0 : i32
    %2 = arith.minsi %1, %c0_i32 : i32
    %c0_i32_0 = arith.constant 0 : i32
    %c0_i32_1 = arith.constant 0 : i32
    return %2, %c0_i32_0 : i32, i32
  }
  func.func @transform_2(%arg0: i32, %arg1: i32) -> (i32, i32, i32) {
    %c0_i32 = arith.constant 0 : i32
    %c0_i32_0 = arith.constant 0 : i32
    %c0_i32_1 = arith.constant 0 : i32
    return %arg0, %c0_i32, %c0_i32_0 : i32, i32, i32
  }
}

</mosaic_0001>

<llo_original>
// kernel: tpu_custom_call.1
$region0: #{tpu_custom_call.1}
  #allocation0 [shape = 'u32[]', space=smem, size = 0x4, offset = 0x4, fixed_abs, tag = 'smem constant byte address 0x4 - core index']
  #allocation1 [shape = 'u32[144,128]{1,0:T(1,128)}', space=vmem, size = 0x12000, scoped, tag = 'internal scratch']
  #allocation2 [shape = 'f32[1,512]{1,0:T(1,128)}', space=vmem, size = 0x800, scoped, tag = 'scratch operand']
  %s0 = inlined_call_operand.hbm [shape: f32[4,512], index: 0, kind: input, shape index: {}]
  %s1 = inlined_call_operand.hbm [shape: f32[4,512], index: 1, kind: input, shape index: {}]
  %s2 = inlined_call_operand.hbm [shape: f32[1,1,1], index: 2, kind: output, shape index: {}]
  %s3 = sld [smem:[#allocation0]]
  $region34: #{tpu_custom_call.1} parent=0
    _
  %s5 = ssub.s32 1, %s3
  %s6 = scalar_select 0, %s5, %s3
  $region1: #{tpu_custom_call.1} parent=0
    #allocation3 [shape = 'u8[8192]{0}', space=vmem, size = 0x2000, scoped, tag = 'input window, operand 0, single buffered']
    #allocation4 [shape = 's32[1]{0}', space=sflag, size = 0x4, scoped, tag = 'scoped memory for tpu_custom_call.1']
    #allocation5 [shape = 's32[1]{0}', space=sflag, size = 0x4, scoped, tag = 'scoped memory for tpu_custom_call.1']
    #allocation6 [shape = 'u8[8192]{0}', space=vmem, size = 0x2000, scoped, tag = 'input window, operand 1, single buffered']
    #allocation7 [shape = 's32[1]{0}', space=sflag, size = 0x4, scoped, tag = 'scoped memory for tpu_custom_call.1']
    #allocation8 [shape = 'u8[512]{0}', space=vmem, size = 0x400, scoped, tag = 'output window, operand 0, single buffered']
    %7 = vsyncpa [#allocation4], 0
    %8 = vsyncpa [#allocation7], 0
    %9 = vsyncpa [#allocation5], 0
    // Predicated region
    $region2: #{tpu_custom_call.1} parent=1 // pred_check
      _
    $region3: #{tpu_custom_call.1} parent=1 // pred_check_branch
      %11 = sbr.rel (0) target = $region5
    $region4: #{tpu_custom_call.1} parent=1 // pred_region
      %s12 = sadd.s32 0, 0
      %p13 = scmp.lt.s32.totalorder %s12, 0
      %s14 = scalar_select %p13, %s12, 0
      %s16 = ssub.s32 256, 256
      %17 = vsyncadd [#allocation4], %s16
      %s18 = smul.addr %s14, 4
      %s19 = smul.addr %s18, 64
      %s20 = scalar_lea.hbm %s0, %s19
      %s22 = sshll.u32 [#allocation3], 4
      %s23 = int_to_ptr.vmem [resolvable:$true] %s22
      %25 = dma.hbm_to_vmem [thread:$0]  %s20, 256, %s23, [#allocation4]
    $region5: #{tpu_custom_call.1} parent=1 // pred_fallthru
      _
    // Predicated region
    $region6: #{tpu_custom_call.1} parent=1 // pred_check
      _
    $region7: #{tpu_custom_call.1} parent=1 // pred_check_branch
      %27 = sbr.rel (0) target = $region9
    $region8: #{tpu_custom_call.1} parent=1 // pred_region
      %s28 = sadd.s32 0, 0
      %p29 = scmp.lt.s32.totalorder %s28, 0
      %s30 = scalar_select %p29, %s28, 0
      %s32 = ssub.s32 256, 256
      %33 = vsyncadd [#allocation7], %s32
      %s34 = smul.addr %s30, 4
      %s35 = smul.addr %s34, 64
      %s36 = scalar_lea.hbm %s1, %s35
      %s38 = sshll.u32 [#allocation6], 4
      %s39 = int_to_ptr.vmem [resolvable:$true] %s38
      %41 = dma.hbm_to_vmem [thread:$0]  %s36, 256, %s39, [#allocation7]
    $region9: #{tpu_custom_call.1} parent=1 // pred_fallthru
      _
    // Predicated region
    $region10: #{tpu_custom_call.1} parent=1 // pred_check
      _
    $region11: #{tpu_custom_call.1} parent=1 // pred_check_branch
      %43 = sbr.rel (0) target = $region13
    $region12: #{tpu_custom_call.1} parent=1 // pred_region
      %44 = dma.done [#allocation4], 256
    $region13: #{tpu_custom_call.1} parent=1 // pred_fallthru
      _
    // Predicated region
    $region14: #{tpu_custom_call.1} parent=1 // pred_check
      _
    $region15: #{tpu_custom_call.1} parent=1 // pred_check_branch
      %46 = sbr.rel (0) target = $region17
    $region16: #{tpu_custom_call.1} parent=1 // pred_region
      %47 = dma.done [#allocation7], 256
    $region17: #{tpu_custom_call.1} parent=1 // pred_fallthru
      _
    %s48 = sadd.s32 0, 0
    %p49 = scmp.lt.s32.totalorder %s48, 0
    %s50 = scalar_select %p49, %s48, 0
    %s51 = sadd.s32 0, 0
    %p52 = scmp.lt.s32.totalorder %s51, 0
    %s53 = scalar_select %p52, %s51, 0
    %p54 = scmp.eq.s32.totalorder 0, 0
    // Predicated region
    $region18: #{tpu_custom_call.1} parent=1 // pred_check
      %p55 = pneg %p54
    $region19: #{tpu_custom_call.1} parent=1 // pred_check_branch
      %57 = sbr.rel (%p55) target = $region21
    $region20: #{tpu_custom_call.1} parent=1 // pred_region
      %v58 = vlaneseq
      %vm59 = vcmp.ge.s32.totalorder %v58, 0
      %vm60 = vcmp.lt.s32.totalorder %v58, 512
      %vm61 = vmand %vm59, %vm60
      %62 = vst.msk [vmem:[#allocation2] sm:$0xf] %vm61, 0.0
    $region21: #{tpu_custom_call.1} parent=1 // pred_fallthru
      _
    %v63 = vld [vmem:[#allocation3] sm:$0xff]
    %v64 = vld [vmem:[#allocation3 + $0x8] sm:$0xff]
    %v65 = vld [vmem:[#allocation6] sm:$0xff]
    %v66 = vld [vmem:[#allocation6 + $0x8] sm:$0xff]
    %v67 = vand.u32 2147483647, %v63
    %v68 = vand.u32 2147483647, %v64
    %v69 = vsub.f32 0.0, %v67
    %v70 = vsub.f32 0.0, %v68
    %v71 = vmul.f32 %v69, 1.442695
    %v72 = vpow.pop %v71
    %v73 = vmul.f32 %v70, 1.442695
    %v74 = vpow.pop %v73
    %v75 = vadd.f32 %v72, 1.0
    %v76 = vlog2.pop %v75
    %v77 = vmul.f32 %v76, 0.6931472
    %v78 = vmul.f32 -0.5, %v72
    %v79 = vadd.f32 %v78, 1.0
    %v80 = vmul.f32 %v79, %v72
    %v81 = vand.u32 2147483647, %v72
    %vm82 = vcmp.lt.f32.partialorder %v81, 0.0004427343
    %v83 = vsel %vm82, %v80, %v77
    %v84 = vadd.f32 %v74, 1.0
    %v85 = vlog2.pop %v84
    %v86 = vmul.f32 %v85, 0.6931472
    %v87 = vmul.f32 -0.5, %v74
    %v88 = vadd.f32 %v87, 1.0
    %v89 = vmul.f32 %v88, %v74
    %v90 = vand.u32 2147483647, %v74
    %vm91 = vcmp.lt.f32.partialorder %v90, 0.0004427343
    %v92 = vsel %vm91, %v89, %v86
    %v93 = vsub.f32 0.0, %v63
    %v94 = vsub.f32 0.0, %v64
    %v95 = vmax.f32 %v93, 0.0
    %v96 = vmax.f32 %v94, 0.0
    %v97 = vadd.f32 %v83, %v95
    %v98 = vadd.f32 %v92, %v96
    %v99 = vsub.f32 1.0, %v65
    %v100 = vsub.f32 1.0, %v66
    %v101 = vmul.f32 %v99, %v63
    %v102 = vmul.f32 %v100, %v64
    %v103 = vadd.f32 %v101, %v97
    %v104 = vadd.f32 %v102, %v98
    %v107 = vcombine.high %v103, %v103
    %v108 = vcombine.high %v104, %v104
    %vm111 = vcmask 1043456
    %v112 = vsel %vm111, %v103, 0.0
    %v113 = vrot.slane %v112, 4
    %v114 = vadd.f32 %v112, %v113
    %v115 = vrot.slane %v114, 2
    %v116 = vadd.f32 %v114, %v115
    %v117 = vrot.slane %v116, 1
    %v118 = vadd.f32 %v116, %v117
    %v119 = vsel %vm111, %v107, 0.0
    %v120 = vrot.slane %v119, 4
    %v121 = vadd.f32 %v119, %v120
    %v122 = vrot.slane %v121, 2
    %v123 = vadd.f32 %v121, %v122
    %v124 = vrot.slane %v123, 1
    %v125 = vadd.f32 %v123, %v124
    %v126 = vsel %vm111, %v104, 0.0
    %v127 = vrot.slane %v126, 4
    %v128 = vadd.f32 %v126, %v127
    %v129 = vrot.slane %v128, 2
    %v130 = vadd.f32 %v128, %v129
    %v131 = vrot.slane %v130, 1
    %v132 = vadd.f32 %v130, %v131
    %v133 = vsel %vm111, %v108, 0.0
    %v134 = vrot.slane %v133, 4
    %v135 = vadd.f32 %v133, %v134
    %v136 = vrot.slane %v135, 2
    %v137 = vadd.f32 %v135, %v136
    %v138 = vrot.slane %v137, 1
    %v139 = vadd.f32 %v137, %v138
    %v140 = vld [vmem:[#allocation2] sm:$0xf]
    %v145 = vcombine.low %v118, %v125
    %v146 = vcombine.low %v132, %v139
    %v148 = vunpack.c.l.s4 1966171168
    %v149 = vunpack.c.0.s8 %v148
    %v150 = vlaneseq
    %v151 = vshrl.u32 %v150, 7
    %v152 = vsub.s32 %v149, %v151
    %v153 = vrot.slane %v145, %v152
    %v155 = vunpack.c.l.s4 1966171168
    %v156 = vunpack.c.0.s8 %v155
    %v157 = vlaneseq
    %v158 = vshrl.u32 %v157, 7
    %v159 = vsub.s32 %v156, %v158
    %v160 = vrot.slane %v146, %v159
    %v161 = vcombine.low %v153, %v160
    %v163 = vunpack.c.l.s4 1966171168
    %v164 = vunpack.c.0.s8 %v163
    %v165 = vlaneseq
    %v166 = vshrl.u32 %v165, 7
    %v167 = vsub.s32 %v164, %v166
    %v168 = vrot.slane %v161, %v167
    %v170 = vadd.f32 %v140, %v168
    %v171 = vlaneseq
    %vm172 = vcmp.ge.s32.totalorder %v171, 0
    %vm173 = vcmp.lt.s32.totalorder %v171, 512
    %vm174 = vmand %vm172, %vm173
    %175 = vst.msk [vmem:[#allocation2] sm:$0xf] %vm174, %v170
    // Predicated region
    $region22: #{tpu_custom_call.1} parent=1 // pred_check
      %p176 = pneg %p54
    $region23: #{tpu_custom_call.1} parent=1 // pred_check_branch
      %178 = sbr.rel (%p176) target = $region25
    $region24: #{tpu_custom_call.1} parent=1 // pred_region
      %v179 = vld [vmem:[#allocation2] sm:$0xf]
      %v181 = vlaneseq
      %v182 = vshrl.u32 %v181, 7
      %v183 = vsub.s32 0, %v182
      %v184 = vrot.slane %v179, %v183
      %v185 = vlaneseq
      %v186 = vshrl.u32 %v185, 7
      %v187 = vsub.s32 1, %v186
      %v188 = vrot.slane %v179, %v187
      %v189 = vlaneseq
      %v190 = vshrl.u32 %v189, 7
      %v191 = vsub.s32 2, %v190
      %v192 = vrot.slane %v179, %v191
      %v193 = vlaneseq
      %v194 = vshrl.u32 %v193, 7
      %v195 = vsub.s32 3, %v194
      %v196 = vrot.slane %v179, %v195
      %vm201 = vcmask 1040384
      %v202 = vsel %vm201, %v184, 0.0
      %v203 = vsel %vm201, %v188, 0.0
      %v204 = vadd.f32 %v202, %v203
      %v205 = vsel %vm201, %v192, 0.0
      %v206 = vadd.f32 %v204, %v205
      %v207 = vsel %vm201, %v196, 0.0
      %v208 = vadd.f32 %v206, %v207
      %209 = vadd.xlane.f32.xlu0 %v208
      %v210 = vpop.xlane.xlu0 %209
      %v211 = vrot.slane %v210, 4
      %v212 = vadd.f32 %v210, %v211
      %v213 = vrot.slane %v212, 2
      %v214 = vadd.f32 %v212, %v213
      %v215 = vrot.slane %v214, 1
      %v216 = vadd.f32 %v214, %v215
      %s217 = vtos %v216
      %v218 = vstv %s217
      %vm219 = vcmask 0
      %220 = vst.msk [vmem:[#allocation8] sm:$0x1] %vm219, %v218
    $region25: #{tpu_custom_call.1} parent=1 // pred_fallthru
      _
    // Predicated region
    $region26: #{tpu_custom_call.1} parent=1 // pred_check
      _
    $region27: #{tpu_custom_call.1} parent=1 // pred_check_branch
      %222 = sbr.rel (0) target = $region29
    $region28: #{tpu_custom_call.1} parent=1 // pred_region
      %s224 = ssub.s32 16, 16
      %225 = vsyncadd [#allocation5], %s224
      %s227 = sshll.u32 [#allocation8], 4
      %s228 = int_to_ptr.vmem [resolvable:$true] %s227
      %230 = dma.vmem_to_hbm [thread:$0]  %s228, 16, %s2, [#allocation5]
    $region29: #{tpu_custom_call.1} parent=1 // pred_fallthru
      _
    // Predicated region
    $region30: #{tpu_custom_call.1} parent=1 // pred_check
      _
    $region31: #{tpu_custom_call.1} parent=1 // pred_check_branch
      %232 = sbr.rel (0) target = $region33
    $region32: #{tpu_custom_call.1} parent=1 // pred_region
      %233 = dma.done [#allocation5], 16
    $region33: #{tpu_custom_call.1} parent=1 // pred_fallthru
      _
    %234 = vsyncpa [#allocation4], 1
    %235 = vsyncpa [#allocation7], 1
    %236 = vsyncpa [#allocation5], 1

</llo_original>
